<compile_context>
chip_gen: v5e
topology: v5e:2x2
jax: 0.10.0
libtpu: 0.0.40
codegen_flags: <defaults>
</compile_context>

<pallas_src>
import functools

import jax
import jax.numpy as jnp
from jax.experimental import pallas as pl
from jax.experimental.pallas import tpu as pltpu

H1_PAD = 512    # 400 padded to a multiple of 128
H2_PAD = 384    # 300 padded to a multiple of 128
OUT_PAD = 128   # action_dim padded to a full lane width


def _round_up(n, m):
    return ((n + m - 1) // m) * m


def actor_kernel(x_ref, w1_ref, b1_ref, w2_ref, b2_ref, w3_ref, b3_ref,
                 o_ref, *, max_action):
    x = x_ref[...]                                    # (TB, state_dim) f32
    # layer 1: Linear(state_dim, 400->512) + ReLU  (bf16 operands, f32 acc)
    h1 = jnp.dot(x.astype(jnp.bfloat16), w1_ref[...],
                 preferred_element_type=jnp.float32) + b1_ref[...]
    h1 = jnp.maximum(h1, 0.0)
    # layer 2: Linear(400->512, 300->384) + ReLU
    h2 = jnp.dot(h1.astype(jnp.bfloat16), w2_ref[...],
                 preferred_element_type=jnp.float32) + b2_ref[...]
    h2 = jnp.maximum(h2, 0.0)
    # head: Linear(300->384, action_dim->128) + tanh, scaled by max_action
    a = jnp.dot(h2.astype(jnp.bfloat16), w3_ref[...],
                preferred_element_type=jnp.float32) + b3_ref[...]
    a = jnp.tanh(a) * max_action
    o_ref[...] = a.astype(o_ref.dtype)


def actor_forward(x, params, max_action, action_dim):
    """x: (B, state_dim) float32. Returns (B, action_dim) float32."""
    B, state_dim = x.shape
    B_pad = max(8, _round_up(B, 8))          # sublane granularity
    if B_pad != B:
        x = jnp.pad(x, ((0, B_pad - B), (0, 0)))

    TB = min(256, B_pad)                     # fills the 256x256 MXU when B is large
    grid = (pl.cdiv(B_pad, TB),)

    resident = lambda i: (0, 0)              # weights/biases stay in VMEM across steps

    out = pl.pallas_call(
        functools.partial(actor_kernel, max_action=float(max_action)),
        out_shape=jax.ShapeDtypeStruct((B_pad, OUT_PAD), jnp.float32),
        grid=grid,
        in_specs=[
            pl.BlockSpec((TB, state_dim), lambda i: (i, 0)),      # x (batch-tiled)
            pl.BlockSpec((state_dim, H1_PAD), resident),          # w1
            pl.BlockSpec((1, H1_PAD), resident),                  # b1
            pl.BlockSpec((H1_PAD, H2_PAD), resident),             # w2
            pl.BlockSpec((1, H2_PAD), resident),                  # b2
            pl.BlockSpec((H2_PAD, OUT_PAD), resident),            # w3
            pl.BlockSpec((1, OUT_PAD), resident),                 # b3
        ],
        out_specs=pl.BlockSpec((TB, OUT_PAD), lambda i: (i, 0)),
        compiler_params=pltpu.CompilerParams(
            dimension_semantics=("parallel",)),
    )(x, params["w1"], params["b1"], params["w2"], params["b2"],
      params["w3"], params["b3"])

    return out[:B, :action_dim]


def init_actor_params(key, state_dim, action_dim):
    """PyTorch nn.Linear-style init (U[-1/sqrt(fan_in), 1/sqrt(fan_in)]).

    Weights are stored transposed (in_features, out_features), zero-padded to
    lane-dense shapes, and cast to bf16. Biases stay f32, zero-padded.
    Zero padding keeps the math exact: padded h1/h2 entries are relu(0)=0 and
    padded weight rows feeding the next layer are zero.
    """
    layers = [
        # (real_in, real_out, padded_in, padded_out)
        (state_dim, 400, state_dim, H1_PAD),
        (400, 300, H1_PAD, H2_PAD),
        (300, action_dim, H2_PAD, OUT_PAD),
    ]
    params = {}
    for i, (fi, fo, pi, po) in enumerate(layers, start=1):
        key, kw, kb = jax.random.split(key, 3)
        bound = 1.0 / float(fi) ** 0.5
        w = jax.random.uniform(kw, (fi, fo), jnp.float32, -bound, bound)
        b = jax.random.uniform(kb, (1, fo), jnp.float32, -bound, bound)
        w_pad = jnp.zeros((pi, po), jnp.float32).at[:fi, :fo].set(w)
        b_pad = jnp.zeros((1, po), jnp.float32).at[:, :fo].set(b)
        params[f"w{i}"] = w_pad.astype(jnp.bfloat16)
        params[f"b{i}"] = b_pad
    return params


def actor_ref(x, params, max_action, action_dim):
    """Pure-JAX reference mimicking the kernel's bf16-operand / f32-acc math."""
    hi = jax.lax.Precision.HIGHEST
    bf = lambda v: v.astype(jnp.bfloat16).astype(jnp.float32)
    w1 = params["w1"].astype(jnp.float32)
    w2 = params["w2"].astype(jnp.float32)
    w3 = params["w3"].astype(jnp.float32)
    h1 = jnp.maximum(jnp.dot(bf(x), w1, precision=hi) + params["b1"], 0.0)
    h2 = jnp.maximum(jnp.dot(bf(h1), w2, precision=hi) + params["b2"], 0.0)
    a = jnp.tanh(jnp.dot(bf(h2), w3, precision=hi) + params["b3"]) * max_action
    return a[:, :action_dim]


if __name__ == "__main__":
    state_dim = 16
    action_dim = 4
    max_action = 2.0
    batch = 2

    key = jax.random.PRNGKey(0)
    key, kx = jax.random.split(key)
    x = jax.random.normal(kx, (batch, state_dim), jnp.float32)
    params = init_actor_params(key, state_dim, action_dim)

    action = actor_forward(x, params, max_action, action_dim)
    action = jax.block_until_ready(action)

    expected = actor_ref(x, params, max_action, action_dim)
    assert action.shape == (batch, action_dim)
    assert jnp.allclose(action, expected, atol=2e-3, rtol=2e-3), "mismatch vs reference"

    print("KERNEL_OK")
</pallas_src>

<mosaic_0001>
module attributes {stable_mosaic.version = 11 : i64} {
  func.func @actor_kernel(%arg0: i32, %arg1: memref<8x16xf32, #tpu.memory_space<vmem>>, %arg2: memref<16x512xbf16, #tpu.memory_space<vmem>>, %arg3: memref<1x512xf32, #tpu.memory_space<vmem>>, %arg4: memref<512x384xbf16, #tpu.memory_space<vmem>>, %arg5: memref<1x384xf32, #tpu.memory_space<vmem>>, %arg6: memref<384x128xbf16, #tpu.memory_space<vmem>>, %arg7: memref<1x128xf32, #tpu.memory_space<vmem>>, %arg8: memref<8x128xf32, #tpu.memory_space<vmem>>) attributes {dimension_semantics = [#tpu.dimension_semantics<parallel>], iteration_bounds = array<i64: 1>, scalar_prefetch = 0 : i64, scratch_operands = 0 : i64, tpu.core_type = #tpu.core_type<tc>, window_params = [{transform_indices = @transform_0, window_bounds = array<i64: 8, 16>}, {pipeline_mode = #tpu.pipeline_mode<synchronous>, transform_indices = @transform_1, window_bounds = array<i64: 16, 512>}, {pipeline_mode = #tpu.pipeline_mode<synchronous>, transform_indices = @transform_2, window_bounds = array<i64: 1, 512>}, {pipeline_mode = #tpu.pipeline_mode<synchronous>, transform_indices = @transform_3, window_bounds = array<i64: 512, 384>}, {pipeline_mode = #tpu.pipeline_mode<synchronous>, transform_indices = @transform_4, window_bounds = array<i64: 1, 384>}, {pipeline_mode = #tpu.pipeline_mode<synchronous>, transform_indices = @transform_5, window_bounds = array<i64: 384, 128>}, {pipeline_mode = #tpu.pipeline_mode<synchronous>, transform_indices = @transform_6, window_bounds = array<i64: 1, 128>}, {transform_indices = @transform_7, window_bounds = array<i64: 8, 128>}]} {
    %c0 = arith.constant 0 : index
    %c0_0 = arith.constant 0 : index
    %0 = vector.load %arg1[%c0, %c0_0] : memref<8x16xf32, #tpu.memory_space<vmem>>, vector<8x16xf32>
    %1 = arith.truncf %0 : vector<8x16xf32> to vector<8x16xbf16>
    %c0_1 = arith.constant 0 : index
    %c0_2 = arith.constant 0 : index
    %2 = vector.load %arg2[%c0_1, %c0_2] : memref<16x512xbf16, #tpu.memory_space<vmem>>, vector<16x512xbf16>
    %cst = arith.constant dense<0.000000e+00> : vector<8x512xf32>
    %3 = tpu.matmul %1, %2, %cst {dimension_numbers = #tpu.dot_dimension_numbers<[1], [0], [0], [1], [0, 0, 1, 1], [], []>} : vector<8x16xbf16>, vector<16x512xbf16>, vector<8x512xf32> -> vector<8x512xf32>
    %c0_3 = arith.constant 0 : index
    %c0_4 = arith.constant 0 : index
    %4 = vector.load %arg3[%c0_3, %c0_4] : memref<1x512xf32, #tpu.memory_space<vmem>>, vector<1x512xf32>
    %5 = vector.broadcast %4 : vector<1x512xf32> to vector<8x512xf32>
    %6 = arith.addf %3, %5 : vector<8x512xf32>
    %cst_5 = arith.constant 0.000000e+00 : f32
    %7 = vector.broadcast %cst_5 : f32 to vector<8x512xf32>
    %8 = arith.maximumf %6, %7 : vector<8x512xf32>
    %9 = arith.truncf %8 : vector<8x512xf32> to vector<8x512xbf16>
    %c0_6 = arith.constant 0 : index
    %c0_7 = arith.constant 0 : index
    %10 = vector.load %arg4[%c0_6, %c0_7] : memref<512x384xbf16, #tpu.memory_space<vmem>>, vector<512x384xbf16>
    %cst_8 = arith.constant dense<0.000000e+00> : vector<8x384xf32>
    %11 = tpu.matmul %9, %10, %cst_8 {dimension_numbers = #tpu.dot_dimension_numbers<[1], [0], [0], [1], [0, 0, 1, 1], [], []>} : vector<8x512xbf16>, vector<512x384xbf16>, vector<8x384xf32> -> vector<8x384xf32>
    %c0_9 = arith.constant 0 : index
    %c0_10 = arith.constant 0 : index
    %12 = vector.load %arg5[%c0_9, %c0_10] : memref<1x384xf32, #tpu.memory_space<vmem>>, vector<1x384xf32>
    %13 = vector.broadcast %12 : vector<1x384xf32> to vector<8x384xf32>
    %14 = arith.addf %11, %13 : vector<8x384xf32>
    %cst_11 = arith.constant 0.000000e+00 : f32
    %15 = vector.broadcast %cst_11 : f32 to vector<8x384xf32>
    %16 = arith.maximumf %14, %15 : vector<8x384xf32>
    %17 = arith.truncf %16 : vector<8x384xf32> to vector<8x384xbf16>
    %c0_12 = arith.constant 0 : index
    %c0_13 = arith.constant 0 : index
    %18 = vector.load %arg6[%c0_12, %c0_13] : memref<384x128xbf16, #tpu.memory_space<vmem>>, vector<384x128xbf16>
    %cst_14 = arith.constant dense<0.000000e+00> : vector<8x128xf32>
    %19 = tpu.matmul %17, %18, %cst_14 {dimension_numbers = #tpu.dot_dimension_numbers<[1], [0], [0], [1], [0, 0, 1, 1], [], []>} : vector<8x384xbf16>, vector<384x128xbf16>, vector<8x128xf32> -> vector<8x128xf32>
    %c0_15 = arith.constant 0 : index
    %c0_16 = arith.constant 0 : index
    %20 = vector.load %arg7[%c0_15, %c0_16] : memref<1x128xf32, #tpu.memory_space<vmem>>, vector<1x128xf32>
    %21 = vector.broadcast %20 : vector<1x128xf32> to vector<8x128xf32>
    %22 = arith.addf %19, %21 : vector<8x128xf32>
    %23 = math.tanh %22 : vector<8x128xf32>
    %cst_17 = arith.constant 2.000000e+00 : f32
    %24 = vector.broadcast %cst_17 : f32 to vector<8x128xf32>
    %25 = arith.mulf %23, %24 : vector<8x128xf32>
    %c0_18 = arith.constant 0 : index
    %c0_19 = arith.constant 0 : index
    %26 = vector.load %arg8[%c0_18, %c0_19] : memref<8x128xf32, #tpu.memory_space<vmem>>, vector<8x128xf32>
    tpu.vector_store %arg8[%c0_18, %c0_19], %25 {strides = array<i32>} : memref<8x128xf32, #tpu.memory_space<vmem>>, vector<8x128xf32>,
    return
  }
  func.func @transform_0(%arg0: i32) -> (i32, i32) {
    %c0_i32 = arith.constant 0 : i32
    %c0_i32_0 = arith.constant 0 : i32
    return %arg0, %c0_i32 : i32, i32
  }
  func.func @transform_1(%arg0: i32) -> (i32, i32) {
    %c0_i32 = arith.constant 0 : i32
    %c0_i32_0 = arith.constant 0 : i32
    %c0_i32_1 = arith.constant 0 : i32
    return %c0_i32, %c0_i32_0 : i32, i32
  }
  func.func @transform_2(%arg0: i32) -> (i32, i32) {
    %c0_i32 = arith.constant 0 : i32
    %c0_i32_0 = arith.constant 0 : i32
    %c0_i32_1 = arith.constant 0 : i32
    return %c0_i32, %c0_i32_0 : i32, i32
  }
  func.func @transform_3(%arg0: i32) -> (i32, i32) {
    %c0_i32 = arith.constant 0 : i32
    %c0_i32_0 = arith.constant 0 : i32
    %c0_i32_1 = arith.constant 0 : i32
    return %c0_i32, %c0_i32_0 : i32, i32
  }
  func.func @transform_4(%arg0: i32) -> (i32, i32) {
    %c0_i32 = arith.constant 0 : i32
    %c0_i32_0 = arith.constant 0 : i32
    %c0_i32_1 = arith.constant 0 : i32
    return %c0_i32, %c0_i32_0 : i32, i32
  }
  func.func @transform_5(%arg0: i32) -> (i32, i32) {
    %c0_i32 = arith.constant 0 : i32
    %c0_i32_0 = arith.constant 0 : i32
    %c0_i32_1 = arith.constant 0 : i32
    return %c0_i32, %c0_i32_0 : i32, i32
  }
  func.func @transform_6(%arg0: i32) -> (i32, i32) {
    %c0_i32 = arith.constant 0 : i32
    %c0_i32_0 = arith.constant 0 : i32
    %c0_i32_1 = arith.constant 0 : i32
    return %c0_i32, %c0_i32_0 : i32, i32
  }
  func.func @transform_7(%arg0: i32) -> (i32, i32) {
    %c0_i32 = arith.constant 0 : i32
    %c0_i32_0 = arith.constant 0 : i32
    return %arg0, %c0_i32 : i32, i32
  }
}

</mosaic_0001>

<llo_original>
// kernel: tpu_custom_call.1
$region0: #{tpu_custom_call.1}
  #allocation0 [shape = 'u32[]', space=smem, size = 0x4, offset = 0x4, fixed_abs, tag = 'smem constant byte address 0x4 - core index']
  #allocation1 [shape = 'u32[72,128]{1,0:T(1,128)}', space=vmem, size = 0x9000, scoped, tag = 'internal scratch']
  %s0 = inlined_call_operand.hbm [shape: f32[8,16], index: 0, kind: input, shape index: {}]
  %s1 = inlined_call_operand.hbm [shape: bf16[16,512], index: 1, kind: input, shape index: {}]
  %s2 = inlined_call_operand.hbm [shape: f32[1,512], index: 2, kind: input, shape index: {}]
  %s3 = inlined_call_operand.hbm [shape: bf16[512,384], index: 3, kind: input, shape index: {}]
  %s4 = inlined_call_operand.vmem [shape: f32[1,384], index: 4, kind: input, shape index: {}]
  %s5 = inlined_call_operand.hbm [shape: bf16[384,128], index: 5, kind: input, shape index: {}]
  %s6 = inlined_call_operand.vmem [shape: f32[1,128], index: 6, kind: input, shape index: {}]
  %s7 = inlined_call_operand.hbm [shape: f32[8,128], index: 7, kind: output, shape index: {}]
  %s8 = sld [smem:[#allocation0]]
  $region58: #{tpu_custom_call.1} parent=0
    _
  %s10 = ssub.s32 1, %s8
  %s11 = scalar_select 0, %s10, %s8
  $region1: #{tpu_custom_call.1} parent=0
    #allocation2 [shape = 'u8[4096]{0}', space=vmem, size = 0x1000, scoped, tag = 'input window, operand 0, single buffered']
    #allocation3 [shape = 's32[1]{0}', space=sflag, size = 0x4, scoped, tag = 'scoped memory for tpu_custom_call.1']
    #allocation4 [shape = 's32[1]{0}', space=sflag, size = 0x4, scoped, tag = 'scoped memory for tpu_custom_call.1']
    #allocation5 [shape = 'u8[16384]{0}', space=vmem, size = 0x4000, scoped, tag = 'input window, operand 1, single buffered']
    #allocation6 [shape = 's32[1]{0}', space=sflag, size = 0x4, scoped, tag = 'scoped memory for tpu_custom_call.1']
    #allocation7 [shape = 'u8[2048]{0}', space=vmem, size = 0x800, scoped, tag = 'input window, operand 2, single buffered']
    #allocation8 [shape = 'u8[393216]{0}', space=vmem, size = 0x60000, scoped, tag = 'input window, operand 3, single buffered']
    #allocation9 [shape = 's32[1]{0}', space=sflag, size = 0x4, scoped, tag = 'scoped memory for tpu_custom_call.1']
    #allocation10 [shape = 'u8[98304]{0}', space=vmem, size = 0x18000, scoped, tag = 'input window, operand 5, single buffered']
    #allocation11 [shape = 'u8[4096]{0}', space=vmem, size = 0x1000, scoped, tag = 'output window, operand 0, single buffered']
    %12 = vsyncpa [#allocation3], 0
    %13 = vsyncpa [#allocation6], 0
    %14 = vsyncpa [#allocation9], 0
    %15 = vsyncpa [#allocation4], 0
    // Predicated region
    $region2: #{tpu_custom_call.1} parent=1 // pred_check
      _
    $region3: #{tpu_custom_call.1} parent=1 // pred_check_branch
      %17 = sbr.rel (0) target = $region5
    $region4: #{tpu_custom_call.1} parent=1 // pred_region
      %19 = vsyncadd [#allocation3], 0
      %s21 = sshll.u32 %s0, 4
      %s22 = int_to_ptr.hbm [resolvable:$true] %s21
      %s23 = sshll.u32 [#allocation2], 4
      %s24 = int_to_ptr.vmem [resolvable:$true] %s23
      %26 = dma.hbm_to_vmem [thread:$0]  %s22, 128, %s24, [#allocation3]
    $region5: #{tpu_custom_call.1} parent=1 // pred_fallthru
      _
    // Predicated region
    $region6: #{tpu_custom_call.1} parent=1 // pred_check
      _
    $region7: #{tpu_custom_call.1} parent=1 // pred_check_branch
      %28 = sbr.rel (0) target = $region9
    $region8: #{tpu_custom_call.1} parent=1 // pred_region
      %30 = vsyncadd [#allocation6], 0
      %s31 = sshll.u32 %s1, 4
      %s32 = int_to_ptr.hbm [resolvable:$true] %s31
      %s33 = sshll.u32 [#allocation5], 4
      %s34 = int_to_ptr.vmem [resolvable:$true] %s33
      %39 = dma.hbm_to_vmem [thread:$0]  %s32, 512, %s34, [#allocation6], 256, 256, 16
    $region9: #{tpu_custom_call.1} parent=1 // pred_fallthru
      _
    // Predicated region
    $region10: #{tpu_custom_call.1} parent=1 // pred_check
      _
    $region11: #{tpu_custom_call.1} parent=1 // pred_check_branch
      %41 = sbr.rel (0) target = $region13
    $region12: #{tpu_custom_call.1} parent=1 // pred_region
      %43 = vsyncadd [#allocation6], 0
      %s45 = sshll.u32 %s2, 4
      %s46 = int_to_ptr.hbm [resolvable:$true] %s45
      %s47 = sshll.u32 [#allocation7], 4
      %s48 = int_to_ptr.vmem [resolvable:$true] %s47
      %50 = dma.hbm_to_vmem [thread:$0]  %s46, 64, %s48, [#allocation6]
    $region13: #{tpu_custom_call.1} parent=1 // pred_fallthru
      _
    // Predicated region
    $region14: #{tpu_custom_call.1} parent=1 // pred_check
      _
    $region15: #{tpu_custom_call.1} parent=1 // pred_check_branch
      %52 = sbr.rel (0) target = $region17
    $region16: #{tpu_custom_call.1} parent=1 // pred_region
      %54 = vsyncadd [#allocation9], 0
      %s55 = sshll.u32 %s3, 4
      %s56 = int_to_ptr.hbm [resolvable:$true] %s55
      %s57 = sshll.u32 [#allocation8], 4
      %s58 = int_to_ptr.vmem [resolvable:$true] %s57
      %63 = dma.hbm_to_vmem [thread:$0]  %s56, 12288, %s58, [#allocation9], 192, 192, 12
    $region17: #{tpu_custom_call.1} parent=1 // pred_fallthru
      _
    // Predicated region
    $region18: #{tpu_custom_call.1} parent=1 // pred_check
      _
    $region19: #{tpu_custom_call.1} parent=1 // pred_check_branch
      %65 = sbr.rel (0) target = $region21
    $region20: #{tpu_custom_call.1} parent=1 // pred_region
      _
    $region21: #{tpu_custom_call.1} parent=1 // pred_fallthru
      _
    // Predicated region
    $region22: #{tpu_custom_call.1} parent=1 // pred_check
      _
    $region23: #{tpu_custom_call.1} parent=1 // pred_check_branch
      %67 = sbr.rel (0) target = $region25
    $region24: #{tpu_custom_call.1} parent=1 // pred_region
      %69 = vsyncadd [#allocation9], 0
      %s70 = sshll.u32 %s5, 4
      %s71 = int_to_ptr.hbm [resolvable:$true] %s70
      %s72 = sshll.u32 [#allocation10], 4
      %s73 = int_to_ptr.vmem [resolvable:$true] %s72
      %78 = dma.hbm_to_vmem [thread:$0]  %s71, 3072, %s73, [#allocation9], 64, 64, 4
    $region25: #{tpu_custom_call.1} parent=1 // pred_fallthru
      _
    // Predicated region
    $region26: #{tpu_custom_call.1} parent=1 // pred_check
      _
    $region27: #{tpu_custom_call.1} parent=1 // pred_check_branch
      %80 = sbr.rel (0) target = $region29
    $region28: #{tpu_custom_call.1} parent=1 // pred_region
      _
    $region29: #{tpu_custom_call.1} parent=1 // pred_fallthru
      _
    // Predicated region
    $region30: #{tpu_custom_call.1} parent=1 // pred_check
      _
    $region31: #{tpu_custom_call.1} parent=1 // pred_check_branch
      %82 = sbr.rel (0) target = $region33
    $region32: #{tpu_custom_call.1} parent=1 // pred_region
      %84 = dma.done [#allocation3], 128
    $region33: #{tpu_custom_call.1} parent=1 // pred_fallthru
      _
    // Predicated region
    $region34: #{tpu_custom_call.1} parent=1 // pred_check
      _
    $region35: #{tpu_custom_call.1} parent=1 // pred_check_branch
      %86 = sbr.rel (0) target = $region37
    $region36: #{tpu_custom_call.1} parent=1 // pred_region
      %88 = dma.done [#allocation6], 512
    $region37: #{tpu_custom_call.1} parent=1 // pred_fallthru
      _
    // Predicated region
    $region38: #{tpu_custom_call.1} parent=1 // pred_check
      _
    $region39: #{tpu_custom_call.1} parent=1 // pred_check_branch
      %90 = sbr.rel (0) target = $region41
    $region40: #{tpu_custom_call.1} parent=1 // pred_region
      %92 = dma.done [#allocation6], 64
    $region41: #{tpu_custom_call.1} parent=1 // pred_fallthru
      _
    // Predicated region
    $region42: #{tpu_custom_call.1} parent=1 // pred_check
      _
    $region43: #{tpu_custom_call.1} parent=1 // pred_check_branch
      %94 = sbr.rel (0) target = $region45
    $region44: #{tpu_custom_call.1} parent=1 // pred_region
      %96 = dma.done [#allocation9], 12288
    $region45: #{tpu_custom_call.1} parent=1 // pred_fallthru
      _
    // Predicated region
    $region46: #{tpu_custom_call.1} parent=1 // pred_check
      _
    $region47: #{tpu_custom_call.1} parent=1 // pred_check_branch
      %98 = sbr.rel (0) target = $region49
    $region48: #{tpu_custom_call.1} parent=1 // pred_region
      %100 = dma.done [#allocation9], 3072
    $region49: #{tpu_custom_call.1} parent=1 // pred_fallthru
      _
    %v102 = vld [vmem:[#allocation2] sm:$0xff]
    %v103 = vpack.c.bf16 %v102, %v102
    %v104 = vld [vmem:[#allocation5] sm:$0xff]
    %v105 = vld [vmem:[#allocation5 + $0x8] sm:$0xff]
    %v106 = vld [vmem:[#allocation5 + $0x10] sm:$0xff]
    %v107 = vld [vmem:[#allocation5 + $0x18] sm:$0xff]
    %v108 = vld [vmem:[#allocation7] sm:$0xf]
    %v110 = vperm.slane %v108, 0
    %v111 = vperm.slane %v108, 1
    %v112 = vperm.slane %v108, 2
    %v113 = vperm.slane %v108, 3
    %v122 = vunpack.c.l.b16 %v104
    %v123 = vunpack.c.h.b16 %v104
    %v124 = vunpack.c.l.b16 %v105
    %v125 = vunpack.c.h.b16 %v105
    %v126 = vunpack.c.l.b16 %v106
    %v127 = vunpack.c.h.b16 %v106
    %v128 = vunpack.c.l.b16 %v107
    %v129 = vunpack.c.h.b16 %v107
    %v130 = vpack.c.b16 %v126, %v122
    %v131 = vpack.c.b16 %v127, %v123
    %v132 = vpack.c.b16 %v128, %v124
    %v133 = vpack.c.b16 %v129, %v125
    %vm138 = vcmask 130048
    %v140 = vsel %vm138, %v103, 0
    %142 = vmatpush.bf16.msra.mxu0 0
    %143 = vmatpush.bf16.msra.mxu0 0
    %144 = vmatpush.bf16.msra.mxu0 0
    %145 = vmatpush.bf16.msra.mxu0 0
    %146 = vmatpush.bf16.msra.mxu0 0
    %147 = vmatpush.bf16.msra.mxu0 0
    %148 = vmatpush.bf16.msra.mxu0 0
    %149 = vmatpush.bf16.msra.mxu0 %v130
    %150 = vmatmul.bf16.gmra.mxu0 %v140
    %v151 = vpop.f32.mrf.mxu0
    %v152 = vadd.f32 %v110, %v151
    %v153 = vpop.f32.mrf.mxu0
    %154 = vdwg.mxu0
    %155 = vmatpush.bf16.msra.mxu0 0
    %156 = vmatpush.bf16.msra.mxu0 0
    %157 = vmatpush.bf16.msra.mxu0 0
    %158 = vmatpush.bf16.msra.mxu0 0
    %159 = vmatpush.bf16.msra.mxu0 0
    %160 = vmatpush.bf16.msra.mxu0 0
    %161 = vmatpush.bf16.msra.mxu0 0
    %162 = vmatpush.bf16.msra.mxu0 %v131
    %163 = vmatmul.bf16.gmra.mxu0 %v140
    %v164 = vpop.f32.mrf.mxu0
    %v165 = vadd.f32 %v111, %v164
    %v166 = vpop.f32.mrf.mxu0
    %167 = vdwg.mxu0
    %168 = vmatpush.bf16.msra.mxu0 0
    %169 = vmatpush.bf16.msra.mxu0 0
    %170 = vmatpush.bf16.msra.mxu0 0
    %171 = vmatpush.bf16.msra.mxu0 0
    %172 = vmatpush.bf16.msra.mxu0 0
    %173 = vmatpush.bf16.msra.mxu0 0
    %174 = vmatpush.bf16.msra.mxu0 0
    %175 = vmatpush.bf16.msra.mxu0 %v132
    %176 = vmatmul.bf16.gmra.mxu0 %v140
    %v177 = vpop.f32.mrf.mxu0
    %v178 = vadd.f32 %v112, %v177
    %v179 = vpop.f32.mrf.mxu0
    %180 = vdwg.mxu0
    %181 = vmatpush.bf16.msra.mxu0 0
    %182 = vmatpush.bf16.msra.mxu0 0
    %183 = vmatpush.bf16.msra.mxu0 0
    %184 = vmatpush.bf16.msra.mxu0 0
    %185 = vmatpush.bf16.msra.mxu0 0
    %186 = vmatpush.bf16.msra.mxu0 0
    %187 = vmatpush.bf16.msra.mxu0 0
    %188 = vmatpush.bf16.msra.mxu0 %v133
    %189 = vmatmul.bf16.gmra.mxu0 %v140
    %v190 = vpop.f32.mrf.mxu0
    %v191 = vadd.f32 %v113, %v190
    %v192 = vpop.f32.mrf.mxu0
    %193 = vdwg.mxu0
    %v194 = vmax.f32 %v152, 0.0
    %v195 = vmax.f32 %v165, 0.0
    %v196 = vmax.f32 %v178, 0.0
    %v197 = vmax.f32 %v191, 0.0
    %v198 = vpack.c.bf16 %v194, %v194
    %v199 = vpack.c.bf16 %v195, %v195
    %v200 = vpack.c.bf16 %v196, %v196
    %v201 = vpack.c.bf16 %v197, %v197
    %v202 = vld [vmem:[#allocation8] sm:$0xff]
    %v203 = vld [vmem:[#allocation8 + $0x8] sm:$0xf]
    %v204 = vld [vmem:[#allocation8 + $0xc] sm:$0xff]
    %v205 = vld [vmem:[#allocation8 + $0x14] sm:$0xf]
    %v206 = vld [vmem:[#allocation8 + $0x18] sm:$0xff]
    %v207 = vld [vmem:[#allocation8 + $0x20] sm:$0xf]
    %v208 = vld [vmem:[#allocation8 + $0x24] sm:$0xff]
    %v209 = vld [vmem:[#allocation8 + $0x2c] sm:$0xf]
    %v210 = vld [vmem:[#allocation8 + $0x30] sm:$0xff]
    %v211 = vld [vmem:[#allocation8 + $0x38] sm:$0xf]
    %v212 = vld [vmem:[#allocation8 + $0x3c] sm:$0xff]
    %v213 = vld [vmem:[#allocation8 + $0x44] sm:$0xf]
    %v214 = vld [vmem:[#allocation8 + $0x48] sm:$0xff]
    %v215 = vld [vmem:[#allocation8 + $0x50] sm:$0xf]
    %v216 = vld [vmem:[#allocation8 + $0x54] sm:$0xff]
    %v217 = vld [vmem:[#allocation8 + $0x5c] sm:$0xf]
    %v218 = vld [vmem:[#allocation8 + $0x60] sm:$0xff]
    %v219 = vld [vmem:[#allocation8 + $0x68] sm:$0xf]
    %v220 = vld [vmem:[#allocation8 + $0x6c] sm:$0xff]
    %v221 = vld [vmem:[#allocation8 + $0x74] sm:$0xf]
    %v222 = vld [vmem:[#allocation8 + $0x78] sm:$0xff]
    %v223 = vld [vmem:[#allocation8 + $0x80] sm:$0xf]
    %v224 = vld [vmem:[#allocation8 + $0x84] sm:$0xff]
    %v225 = vld [vmem:[#allocation8 + $0x8c] sm:$0xf]
    %v226 = vld [vmem:[#allocation8 + $0x90] sm:$0xff]
    %v227 = vld [vmem:[#allocation8 + $0x98] sm:$0xf]
    %v228 = vld [vmem:[#allocation8 + $0x9c] sm:$0xff]
    %v229 = vld [vmem:[#allocation8 + $0xa4] sm:$0xf]
    %v230 = vld [vmem:[#allocation8 + $0xa8] sm:$0xff]
    %v231 = vld [vmem:[#allocation8 + $0xb0] sm:$0xf]
    %v232 = vld [vmem:[#allocation8 + $0xb4] sm:$0xff]
    %v233 = vld [vmem:[#allocation8 + $0xbc] sm:$0xf]
    %v234 = vld [vmem:[#allocation8 + $0xc0] sm:$0xff]
    %v235 = vld [vmem:[#allocation8 + $0xc8] sm:$0xf]
    %v236 = vld [vmem:[#allocation8 + $0xcc] sm:$0xff]
    %v237 = vld [vmem:[#allocation8 + $0xd4] sm:$0xf]
    %v238 = vld [vmem:[#allocation8 + $0xd8] sm:$0xff]
    %v239 = vld [vmem:[#allocation8 + $0xe0] sm:$0xf]
    %v240 = vld [vmem:[#allocation8 + $0xe4] sm:$0xff]
    %v241 = vld [vmem:[#allocation8 + $0xec] sm:$0xf]
    %v242 = vld [vmem:[#allocation8 + $0xf0] sm:$0xff]
    %v243 = vld [vmem:[#allocation8 + $0xf8] sm:$0xf]
    %v244 = vld [vmem:[#allocation8 + $0xfc] sm:$0xff]
    %v245 = vld [vmem:[#allocation8 + $0x104] sm:$0xf]
    %v246 = vld [vmem:[#allocation8 + $0x108] sm:$0xff]
    %v247 = vld [vmem:[#allocation8 + $0x110] sm:$0xf]
    %v248 = vld [vmem:[#allocation8 + $0x114] sm:$0xff]
    %v249 = vld [vmem:[#allocation8 + $0x11c] sm:$0xf]
    %v250 = vld [vmem:[#allocation8 + $0x120] sm:$0xff]
    %v251 = vld [vmem:[#allocation8 + $0x128] sm:$0xf]
    %v252 = vld [vmem:[#allocation8 + $0x12c] sm:$0xff]
    %v253 = vld [vmem:[#allocation8 + $0x134] sm:$0xf]
    %v254 = vld [vmem:[#allocation8 + $0x138] sm:$0xff]
    %v255 = vld [vmem:[#allocation8 + $0x140] sm:$0xf]
    %v256 = vld [vmem:[#allocation8 + $0x144] sm:$0xff]
    %v257 = vld [vmem:[#allocation8 + $0x14c] sm:$0xf]
    %v258 = vld [vmem:[#allocation8 + $0x150] sm:$0xff]
    %v259 = vld [vmem:[#allocation8 + $0x158] sm:$0xf]
    %v260 = vld [vmem:[#allocation8 + $0x15c] sm:$0xff]
    %v261 = vld [vmem:[#allocation8 + $0x164] sm:$0xf]
    %v262 = vld [vmem:[#allocation8 + $0x168] sm:$0xff]
    %v263 = vld [vmem:[#allocation8 + $0x170] sm:$0xf]
    %v264 = vld [vmem:[#allocation8 + $0x174] sm:$0xff]
    %v265 = vld [vmem:[#allocation8 + $0x17c] sm:$0xf]
    %v266 = vld [vmem:[#allocation8 + $0x180] sm:$0xff]
    %v267 = vld [vmem:[#allocation8 + $0x188] sm:$0xf]
    %v268 = vld [vmem:[#allocation8 + $0x18c] sm:$0xff]
    %v269 = vld [vmem:[#allocation8 + $0x194] sm:$0xf]
    %v270 = vld [vmem:[#allocation8 + $0x198] sm:$0xff]
    %v271 = vld [vmem:[#allocation8 + $0x1a0] sm:$0xf]
    %v272 = vld [vmem:[#allocation8 + $0x1a4] sm:$0xff]
    %v273 = vld [vmem:[#allocation8 + $0x1ac] sm:$0xf]
    %v274 = vld [vmem:[#allocation8 + $0x1b0] sm:$0xff]
    %v275 = vld [vmem:[#allocation8 + $0x1b8] sm:$0xf]
    %v276 = vld [vmem:[#allocation8 + $0x1bc] sm:$0xff]
    %v277 = vld [vmem:[#allocation8 + $0x1c4] sm:$0xf]
    %v278 = vld [vmem:[#allocation8 + $0x1c8] sm:$0xff]
    %v279 = vld [vmem:[#allocation8 + $0x1d0] sm:$0xf]
    %v280 = vld [vmem:[#allocation8 + $0x1d4] sm:$0xff]
    %v281 = vld [vmem:[#allocation8 + $0x1dc] sm:$0xf]
    %v282 = vld [vmem:[#allocation8 + $0x1e0] sm:$0xff]
    %v283 = vld [vmem:[#allocation8 + $0x1e8] sm:$0xf]
    %v284 = vld [vmem:[#allocation8 + $0x1ec] sm:$0xff]
    %v285 = vld [vmem:[#allocation8 + $0x1f4] sm:$0xf]
    %v286 = vld [vmem:[#allocation8 + $0x1f8] sm:$0xff]
    %v287 = vld [vmem:[#allocation8 + $0x200] sm:$0xf]
    %v288 = vld [vmem:[#allocation8 + $0x204] sm:$0xff]
    %v289 = vld [vmem:[#allocation8 + $0x20c] sm:$0xf]
    %v290 = vld [vmem:[#allocation8 + $0x210] sm:$0xff]
    %v291 = vld [vmem:[#allocation8 + $0x218] sm:$0xf]
    %v292 = vld [vmem:[#allocation8 + $0x21c] sm:$0xff]
    %v293 = vld [vmem:[#allocation8 + $0x224] sm:$0xf]
    %v294 = vld [vmem:[#allocation8 + $0x228] sm:$0xff]
    %v295 = vld [vmem:[#allocation8 + $0x230] sm:$0xf]
    %v296 = vld [vmem:[#allocation8 + $0x234] sm:$0xff]
    %v297 = vld [vmem:[#allocation8 + $0x23c] sm:$0xf]
    %v298 = vld [vmem:[#allocation8 + $0x240] sm:$0xff]
    %v299 = vld [vmem:[#allocation8 + $0x248] sm:$0xf]
    %v300 = vld [vmem:[#allocation8 + $0x24c] sm:$0xff]
    %v301 = vld [vmem:[#allocation8 + $0x254] sm:$0xf]
    %v302 = vld [vmem:[#allocation8 + $0x258] sm:$0xff]
    %v303 = vld [vmem:[#allocation8 + $0x260] sm:$0xf]
    %v304 = vld [vmem:[#allocation8 + $0x264] sm:$0xff]
    %v305 = vld [vmem:[#allocation8 + $0x26c] sm:$0xf]
    %v306 = vld [vmem:[#allocation8 + $0x270] sm:$0xff]
    %v307 = vld [vmem:[#allocation8 + $0x278] sm:$0xf]
    %v308 = vld [vmem:[#allocation8 + $0x27c] sm:$0xff]
    %v309 = vld [vmem:[#allocation8 + $0x284] sm:$0xf]
    %v310 = vld [vmem:[#allocation8 + $0x288] sm:$0xff]
    %v311 = vld [vmem:[#allocation8 + $0x290] sm:$0xf]
    %v312 = vld [vmem:[#allocation8 + $0x294] sm:$0xff]
    %v313 = vld [vmem:[#allocation8 + $0x29c] sm:$0xf]
    %v314 = vld [vmem:[#allocation8 + $0x2a0] sm:$0xff]
    %v315 = vld [vmem:[#allocation8 + $0x2a8] sm:$0xf]
    %v316 = vld [vmem:[#allocation8 + $0x2ac] sm:$0xff]
    %v317 = vld [vmem:[#allocation8 + $0x2b4] sm:$0xf]
    %v318 = vld [vmem:[#allocation8 + $0x2b8] sm:$0xff]
    %v319 = vld [vmem:[#allocation8 + $0x2c0] sm:$0xf]
    %v320 = vld [vmem:[#allocation8 + $0x2c4] sm:$0xff]
    %v321 = vld [vmem:[#allocation8 + $0x2cc] sm:$0xf]
    %v322 = vld [vmem:[#allocation8 + $0x2d0] sm:$0xff]
    %v323 = vld [vmem:[#allocation8 + $0x2d8] sm:$0xf]
    %v324 = vld [vmem:[#allocation8 + $0x2dc] sm:$0xff]
    %v325 = vld [vmem:[#allocation8 + $0x2e4] sm:$0xf]
    %v326 = vld [vmem:[#allocation8 + $0x2e8] sm:$0xff]
    %v327 = vld [vmem:[#allocation8 + $0x2f0] sm:$0xf]
    %v328 = vld [vmem:[#allocation8 + $0x2f4] sm:$0xff]
    %v329 = vld [vmem:[#allocation8 + $0x2fc] sm:$0xf]
    %v330 = vld [vmem:[%s4] sm:$0x7]
    %v332 = vperm.slane %v330, 0
    %v333 = vperm.slane %v330, 1
    %v334 = vperm.slane %v330, 2
    %v466 = vunpack.c.l.b16 %v202
    %v467 = vunpack.c.h.b16 %v202
    %v468 = vunpack.c.l.b16 %v203
    %v469 = vunpack.c.l.b16 %v204
    %v470 = vunpack.c.h.b16 %v204
    %v471 = vunpack.c.l.b16 %v205
    %v472 = vunpack.c.l.b16 %v206
    %v473 = vunpack.c.h.b16 %v206
    %v474 = vunpack.c.l.b16 %v207
    %v475 = vunpack.c.l.b16 %v208
    %v476 = vunpack.c.h.b16 %v208
    %v477 = vunpack.c.l.b16 %v209
    %v478 = vunpack.c.l.b16 %v210
    %v479 = vunpack.c.h.b16 %v210
    %v480 = vunpack.c.l.b16 %v211
    %v481 = vunpack.c.l.b16 %v212
    %v482 = vunpack.c.h.b16 %v212
    %v483 = vunpack.c.l.b16 %v213
    %v484 = vunpack.c.l.b16 %v214
    %v485 = vunpack.c.h.b16 %v214
    %v486 = vunpack.c.l.b16 %v215
    %v487 = vunpack.c.l.b16 %v216
    %v488 = vunpack.c.h.b16 %v216
    %v489 = vunpack.c.l.b16 %v217
    %v490 = vunpack.c.l.b16 %v218
    %v491 = vunpack.c.h.b16 %v218
    %v492 = vunpack.c.l.b16 %v219
    %v493 = vunpack.c.l.b16 %v220
    %v494 = vunpack.c.h.b16 %v220
    %v495 = vunpack.c.l.b16 %v221
    %v496 = vunpack.c.l.b16 %v222
    %v497 = vunpack.c.h.b16 %v222
    %v498 = vunpack.c.l.b16 %v223
    %v499 = vunpack.c.l.b16 %v224
    %v500 = vunpack.c.h.b16 %v224
    %v501 = vunpack.c.l.b16 %v225
    %v502 = vunpack.c.l.b16 %v226
    %v503 = vunpack.c.h.b16 %v226
    %v504 = vunpack.c.l.b16 %v227
    %v505 = vunpack.c.l.b16 %v228
    %v506 = vunpack.c.h.b16 %v228
    %v507 = vunpack.c.l.b16 %v229
    %v508 = vunpack.c.l.b16 %v230
    %v509 = vunpack.c.h.b16 %v230
    %v510 = vunpack.c.l.b16 %v231
    %v511 = vunpack.c.l.b16 %v232
    %v512 = vunpack.c.h.b16 %v232
    %v513 = vunpack.c.l.b16 %v233
    %v514 = vunpack.c.l.b16 %v234
    %v515 = vunpack.c.h.b16 %v234
    %v516 = vunpack.c.l.b16 %v235
    %v517 = vunpack.c.l.b16 %v236
    %v518 = vunpack.c.h.b16 %v236
    %v519 = vunpack.c.l.b16 %v237
    %v520 = vunpack.c.l.b16 %v238
    %v521 = vunpack.c.h.b16 %v238
    %v522 = vunpack.c.l.b16 %v239
    %v523 = vunpack.c.l.b16 %v240
    %v524 = vunpack.c.h.b16 %v240
    %v525 = vunpack.c.l.b16 %v241
    %v526 = vunpack.c.l.b16 %v242
    %v527 = vunpack.c.h.b16 %v242
    %v528 = vunpack.c.l.b16 %v243
    %v529 = vunpack.c.l.b16 %v244
    %v530 = vunpack.c.h.b16 %v244
    %v531 = vunpack.c.l.b16 %v245
    %v532 = vunpack.c.l.b16 %v246
    %v533 = vunpack.c.h.b16 %v246
    %v534 = vunpack.c.l.b16 %v247
    %v535 = vunpack.c.l.b16 %v248
    %v536 = vunpack.c.h.b16 %v248
    %v537 = vunpack.c.l.b16 %v249
    %v538 = vunpack.c.l.b16 %v250
    %v539 = vunpack.c.h.b16 %v250
    %v540 = vunpack.c.l.b16 %v251
    %v541 = vunpack.c.l.b16 %v252
    %v542 = vunpack.c.h.b16 %v252
    %v543 = vunpack.c.l.b16 %v253
    %v544 = vunpack.c.l.b16 %v254
    %v545 = vunpack.c.h.b16 %v254
    %v546 = vunpack.c.l.b16 %v255
    %v547 = vunpack.c.l.b16 %v256
    %v548 = vunpack.c.h.b16 %v256
    %v549 = vunpack.c.l.b16 %v257
    %v550 = vunpack.c.l.b16 %v258
    %v551 = vunpack.c.h.b16 %v258
    %v552 = vunpack.c.l.b16 %v259
    %v553 = vunpack.c.l.b16 %v260
    %v554 = vunpack.c.h.b16 %v260
    %v555 = vunpack.c.l.b16 %v261
    %v556 = vunpack.c.l.b16 %v262
    %v557 = vunpack.c.h.b16 %v262
    %v558 = vunpack.c.l.b16 %v263
    %v559 = vunpack.c.l.b16 %v264
    %v560 = vunpack.c.h.b16 %v264
    %v561 = vunpack.c.l.b16 %v265
    %v562 = vunpack.c.l.b16 %v266
    %v563 = vunpack.c.h.b16 %v266
    %v564 = vunpack.c.l.b16 %v267
    %v565 = vunpack.c.l.b16 %v268
    %v566 = vunpack.c.h.b16 %v268
    %v567 = vunpack.c.l.b16 %v269
    %v568 = vunpack.c.l.b16 %v270
    %v569 = vunpack.c.h.b16 %v270
    %v570 = vunpack.c.l.b16 %v271
    %v571 = vunpack.c.l.b16 %v272
    %v572 = vunpack.c.h.b16 %v272
    %v573 = vunpack.c.l.b16 %v273
    %v574 = vunpack.c.l.b16 %v274
    %v575 = vunpack.c.h.b16 %v274
    %v576 = vunpack.c.l.b16 %v275
    %v577 = vunpack.c.l.b16 %v276
    %v578 = vunpack.c.h.b16 %v276
    %v579 = vunpack.c.l.b16 %v277
    %v580 = vunpack.c.l.b16 %v278
    %v581 = vunpack.c.h.b16 %v278
    %v582 = vunpack.c.l.b16 %v279
    %v583 = vunpack.c.l.b16 %v280
    %v584 = vunpack.c.h.b16 %v280
    %v585 = vunpack.c.l.b16 %v281
    %v586 = vunpack.c.l.b16 %v282
    %v587 = vunpack.c.h.b16 %v282
    %v588 = vunpack.c.l.b16 %v283
    %v589 = vunpack.c.l.b16 %v284
    %v590 = vunpack.c.h.b16 %v284
    %v591 = vunpack.c.l.b16 %v285
    %v592 = vunpack.c.l.b16 %v286
    %v593 = vunpack.c.h.b16 %v286
    %v594 = vunpack.c.l.b16 %v287
    %v595 = vunpack.c.l.b16 %v288
    %v596 = vunpack.c.h.b16 %v288
    %v597 = vunpack.c.l.b16 %v289
    %v598 = vunpack.c.l.b16 %v290
    %v599 = vunpack.c.h.b16 %v290
    %v600 = vunpack.c.l.b16 %v291
    %v601 = vunpack.c.l.b16 %v292
    %v602 = vunpack.c.h.b16 %v292
    %v603 = vunpack.c.l.b16 %v293
    %v604 = vunpack.c.l.b16 %v294
    %v605 = vunpack.c.h.b16 %v294
    %v606 = vunpack.c.l.b16 %v295
    %v607 = vunpack.c.l.b16 %v296
    %v608 = vunpack.c.h.b16 %v296
    %v609 = vunpack.c.l.b16 %v297
    %v610 = vunpack.c.l.b16 %v298
    %v611 = vunpack.c.h.b16 %v298
    %v612 = vunpack.c.l.b16 %v299
    %v613 = vunpack.c.l.b16 %v300
    %v614 = vunpack.c.h.b16 %v300
    %v615 = vunpack.c.l.b16 %v301
    %v616 = vunpack.c.l.b16 %v302
    %v617 = vunpack.c.h.b16 %v302
    %v618 = vunpack.c.l.b16 %v303
    %v619 = vunpack.c.l.b16 %v304
    %v620 = vunpack.c.h.b16 %v304
    %v621 = vunpack.c.l.b16 %v305
    %v622 = vunpack.c.l.b16 %v306
    %v623 = vunpack.c.h.b16 %v306
    %v624 = vunpack.c.l.b16 %v307
    %v625 = vunpack.c.l.b16 %v308
    %v626 = vunpack.c.h.b16 %v308
    %v627 = vunpack.c.l.b16 %v309
    %v628 = vunpack.c.l.b16 %v310
    %v629 = vunpack.c.h.b16 %v310
    %v630 = vunpack.c.l.b16 %v311
    %v631 = vunpack.c.l.b16 %v312
    %v632 = vunpack.c.h.b16 %v312
    %v633 = vunpack.c.l.b16 %v313
    %v634 = vunpack.c.l.b16 %v314
    %v635 = vunpack.c.h.b16 %v314
    %v636 = vunpack.c.l.b16 %v315
    %v637 = vunpack.c.l.b16 %v316
    %v638 = vunpack.c.h.b16 %v316
    %v639 = vunpack.c.l.b16 %v317
    %v640 = vunpack.c.l.b16 %v318
    %v641 = vunpack.c.h.b16 %v318
    %v642 = vunpack.c.l.b16 %v319
    %v643 = vunpack.c.l.b16 %v320
    %v644 = vunpack.c.h.b16 %v320
    %v645 = vunpack.c.l.b16 %v321
    %v646 = vunpack.c.l.b16 %v322
    %v647 = vunpack.c.h.b16 %v322
    %v648 = vunpack.c.l.b16 %v323
    %v649 = vunpack.c.l.b16 %v324
    %v650 = vunpack.c.h.b16 %v324
    %v651 = vunpack.c.l.b16 %v325
    %v652 = vunpack.c.l.b16 %v326
    %v653 = vunpack.c.h.b16 %v326
    %v654 = vunpack.c.l.b16 %v327
    %v655 = vunpack.c.l.b16 %v328
    %v656 = vunpack.c.h.b16 %v328
    %v657 = vunpack.c.l.b16 %v329
    %v658 = vpack.c.b16 %v469, %v466
    %v659 = vpack.c.b16 %v470, %v467
    %v660 = vpack.c.b16 %v471, %v468
    %v661 = vpack.c.b16 %v475, %v472
    %v662 = vpack.c.b16 %v476, %v473
    %v663 = vpack.c.b16 %v477, %v474
    %v664 = vpack.c.b16 %v481, %v478
    %v665 = vpack.c.b16 %v482, %v479
    %v666 = vpack.c.b16 %v483, %v480
    %v667 = vpack.c.b16 %v487, %v484
    %v668 = vpack.c.b16 %v488, %v485
    %v669 = vpack.c.b16 %v489, %v486
    %v670 = vpack.c.b16 %v493, %v490
    %v671 = vpack.c.b16 %v494, %v491
    %v672 = vpack.c.b16 %v495, %v492
    %v673 = vpack.c.b16 %v499, %v496
    %v674 = vpack.c.b16 %v500, %v497
    %v675 = vpack.c.b16 %v501, %v498
    %v676 = vpack.c.b16 %v505, %v502
    %v677 = vpack.c.b16 %v506, %v503
    %v678 = vpack.c.b16 %v507, %v504
    %v679 = vpack.c.b16 %v511, %v508
    %v680 = vpack.c.b16 %v512, %v509
    %v681 = vpack.c.b16 %v513, %v510
    %v682 = vpack.c.b16 %v517, %v514
    %v683 = vpack.c.b16 %v518, %v515
    %v684 = vpack.c.b16 %v519, %v516
    %v685 = vpack.c.b16 %v523, %v520
    %v686 = vpack.c.b16 %v524, %v521
    %v687 = vpack.c.b16 %v525, %v522
    %v688 = vpack.c.b16 %v529, %v526
    %v689 = vpack.c.b16 %v530, %v527
    %v690 = vpack.c.b16 %v531, %v528
    %v691 = vpack.c.b16 %v535, %v532
    %v692 = vpack.c.b16 %v536, %v533
    %v693 = vpack.c.b16 %v537, %v534
    %v694 = vpack.c.b16 %v541, %v538
    %v695 = vpack.c.b16 %v542, %v539
    %v696 = vpack.c.b16 %v543, %v540
    %v697 = vpack.c.b16 %v547, %v544
    %v698 = vpack.c.b16 %v548, %v545
    %v699 = vpack.c.b16 %v549, %v546
    %v700 = vpack.c.b16 %v553, %v550
    %v701 = vpack.c.b16 %v554, %v551
    %v702 = vpack.c.b16 %v555, %v552
    %v703 = vpack.c.b16 %v559, %v556
    %v704 = vpack.c.b16 %v560, %v557
    %v705 = vpack.c.b16 %v561, %v558
    %v706 = vpack.c.b16 %v565, %v562
    %v707 = vpack.c.b16 %v566, %v563
    %v708 = vpack.c.b16 %v567, %v564
    %v709 = vpack.c.b16 %v571, %v568
    %v710 = vpack.c.b16 %v572, %v569
    %v711 = vpack.c.b16 %v573, %v570
    %v712 = vpack.c.b16 %v577, %v574
    %v713 = vpack.c.b16 %v578, %v575
    %v714 = vpack.c.b16 %v579, %v576
    %v715 = vpack.c.b16 %v583, %v580
    %v716 = vpack.c.b16 %v584, %v581
    %v717 = vpack.c.b16 %v585, %v582
    %v718 = vpack.c.b16 %v589, %v586
    %v719 = vpack.c.b16 %v590, %v587
    %v720 = vpack.c.b16 %v591, %v588
    %v721 = vpack.c.b16 %v595, %v592
    %v722 = vpack.c.b16 %v596, %v593
    %v723 = vpack.c.b16 %v597, %v594
    %v724 = vpack.c.b16 %v601, %v598
    %v725 = vpack.c.b16 %v602, %v599
    %v726 = vpack.c.b16 %v603, %v600
    %v727 = vpack.c.b16 %v607, %v604
    %v728 = vpack.c.b16 %v608, %v605
    %v729 = vpack.c.b16 %v609, %v606
    %v730 = vpack.c.b16 %v613, %v610
    %v731 = vpack.c.b16 %v614, %v611
    %v732 = vpack.c.b16 %v615, %v612
    %v733 = vpack.c.b16 %v619, %v616
    %v734 = vpack.c.b16 %v620, %v617
    %v735 = vpack.c.b16 %v621, %v618
    %v736 = vpack.c.b16 %v625, %v622
    %v737 = vpack.c.b16 %v626, %v623
    %v738 = vpack.c.b16 %v627, %v624
    %v739 = vpack.c.b16 %v631, %v628
    %v740 = vpack.c.b16 %v632, %v629
    %v741 = vpack.c.b16 %v633, %v630
    %v742 = vpack.c.b16 %v637, %v634
    %v743 = vpack.c.b16 %v638, %v635
    %v744 = vpack.c.b16 %v639, %v636
    %v745 = vpack.c.b16 %v643, %v640
    %v746 = vpack.c.b16 %v644, %v641
    %v747 = vpack.c.b16 %v645, %v642
    %v748 = vpack.c.b16 %v649, %v646
    %v749 = vpack.c.b16 %v650, %v647
    %v750 = vpack.c.b16 %v651, %v648
    %v751 = vpack.c.b16 %v655, %v652
    %v752 = vpack.c.b16 %v656, %v653
    %v753 = vpack.c.b16 %v657, %v654
    %850 = vmatpush.bf16.msra.mxu0 %v679
    %851 = vmatpush.bf16.msra.mxu0 %v676
    %852 = vmatpush.bf16.msra.mxu0 %v673
    %853 = vmatpush.bf16.msra.mxu0 %v670
    %854 = vmatpush.bf16.msra.mxu0 %v667
    %855 = vmatpush.bf16.msra.mxu0 %v664
    %856 = vmatpush.bf16.msra.mxu0 %v661
    %857 = vmatpush.bf16.msra.mxu0 %v658
    %858 = vmatmul.bf16.gmra.mxu0 %v198
    %v859 = vpop.f32.mrf.mxu0
    %v860 = vadd.f32 %v332, %v859
    %v861 = vpop.f32.mrf.mxu0
    %862 = vdwg.mxu0
    %863 = vmatpush.bf16.msra.mxu0 %v703
    %864 = vmatpush.bf16.msra.mxu0 %v700
    %865 = vmatpush.bf16.msra.mxu0 %v697
    %866 = vmatpush.bf16.msra.mxu0 %v694
    %867 = vmatpush.bf16.msra.mxu0 %v691
    %868 = vmatpush.bf16.msra.mxu0 %v688
    %869 = vmatpush.bf16.msra.mxu0 %v685
    %870 = vmatpush.bf16.msra.mxu0 %v682
    %871 = vmatmul.bf16.gmra.mxu0 %v199
    %v872 = vpop.f32.mrf.mxu0
    %v873 = vadd.f32 %v860, %v872
    %v874 = vpop.f32.mrf.mxu0
    %875 = vdwg.mxu0
    %876 = vmatpush.bf16.msra.mxu0 %v727
    %877 = vmatpush.bf16.msra.mxu0 %v724
    %878 = vmatpush.bf16.msra.mxu0 %v721
    %879 = vmatpush.bf16.msra.mxu0 %v718
    %880 = vmatpush.bf16.msra.mxu0 %v715
    %881 = vmatpush.bf16.msra.mxu0 %v712
    %882 = vmatpush.bf16.msra.mxu0 %v709
    %883 = vmatpush.bf16.msra.mxu0 %v706
    %884 = vmatmul.bf16.gmra.mxu0 %v200
    %v885 = vpop.f32.mrf.mxu0
    %v886 = vadd.f32 %v873, %v885
    %v887 = vpop.f32.mrf.mxu0
    %888 = vdwg.mxu0
    %889 = vmatpush.bf16.msra.mxu0 %v751
    %890 = vmatpush.bf16.msra.mxu0 %v748
    %891 = vmatpush.bf16.msra.mxu0 %v745
    %892 = vmatpush.bf16.msra.mxu0 %v742
    %893 = vmatpush.bf16.msra.mxu0 %v739
    %894 = vmatpush.bf16.msra.mxu0 %v736
    %895 = vmatpush.bf16.msra.mxu0 %v733
    %896 = vmatpush.bf16.msra.mxu0 %v730
    %897 = vmatmul.bf16.gmra.mxu0 %v201
    %v898 = vpop.f32.mrf.mxu0
    %v899 = vadd.f32 %v886, %v898
    %v900 = vpop.f32.mrf.mxu0
    %901 = vdwg.mxu0
    %902 = vmatpush.bf16.msra.mxu0 %v680
    %903 = vmatpush.bf16.msra.mxu0 %v677
    %904 = vmatpush.bf16.msra.mxu0 %v674
    %905 = vmatpush.bf16.msra.mxu0 %v671
    %906 = vmatpush.bf16.msra.mxu0 %v668
    %907 = vmatpush.bf16.msra.mxu0 %v665
    %908 = vmatpush.bf16.msra.mxu0 %v662
    %909 = vmatpush.bf16.msra.mxu0 %v659
    %910 = vmatmul.bf16.gmra.mxu0 %v198
    %v911 = vpop.f32.mrf.mxu0
    %v912 = vadd.f32 %v333, %v911
    %v913 = vpop.f32.mrf.mxu0
    %914 = vdwg.mxu0
    %915 = vmatpush.bf16.msra.mxu0 %v704
    %916 = vmatpush.bf16.msra.mxu0 %v701
    %917 = vmatpush.bf16.msra.mxu0 %v698
    %918 = vmatpush.bf16.msra.mxu0 %v695
    %919 = vmatpush.bf16.msra.mxu0 %v692
    %920 = vmatpush.bf16.msra.mxu0 %v689
    %921 = vmatpush.bf16.msra.mxu0 %v686
    %922 = vmatpush.bf16.msra.mxu0 %v683
    %923 = vmatmul.bf16.gmra.mxu0 %v199
    %v924 = vpop.f32.mrf.mxu0
    %v925 = vadd.f32 %v912, %v924
    %v926 = vpop.f32.mrf.mxu0
    %927 = vdwg.mxu0
    %928 = vmatpush.bf16.msra.mxu0 %v728
    %929 = vmatpush.bf16.msra.mxu0 %v725
    %930 = vmatpush.bf16.msra.mxu0 %v722
    %931 = vmatpush.bf16.msra.mxu0 %v719
    %932 = vmatpush.bf16.msra.mxu0 %v716
    %933 = vmatpush.bf16.msra.mxu0 %v713
    %934 = vmatpush.bf16.msra.mxu0 %v710
    %935 = vmatpush.bf16.msra.mxu0 %v707
    %936 = vmatmul.bf16.gmra.mxu0 %v200
    %v937 = vpop.f32.mrf.mxu0
    %v938 = vadd.f32 %v925, %v937
    %v939 = vpop.f32.mrf.mxu0
    %940 = vdwg.mxu0
    %941 = vmatpush.bf16.msra.mxu0 %v752
    %942 = vmatpush.bf16.msra.mxu0 %v749
    %943 = vmatpush.bf16.msra.mxu0 %v746
    %944 = vmatpush.bf16.msra.mxu0 %v743
    %945 = vmatpush.bf16.msra.mxu0 %v740
    %946 = vmatpush.bf16.msra.mxu0 %v737
    %947 = vmatpush.bf16.msra.mxu0 %v734
    %948 = vmatpush.bf16.msra.mxu0 %v731
    %949 = vmatmul.bf16.gmra.mxu0 %v201
    %v950 = vpop.f32.mrf.mxu0
    %v951 = vadd.f32 %v938, %v950
    %v952 = vpop.f32.mrf.mxu0
    %953 = vdwg.mxu0
    %954 = vmatpush.bf16.msra.mxu0 %v681
    %955 = vmatpush.bf16.msra.mxu0 %v678
    %956 = vmatpush.bf16.msra.mxu0 %v675
    %957 = vmatpush.bf16.msra.mxu0 %v672
    %958 = vmatpush.bf16.msra.mxu0 %v669
    %959 = vmatpush.bf16.msra.mxu0 %v666
    %960 = vmatpush.bf16.msra.mxu0 %v663
    %961 = vmatpush.bf16.msra.mxu0 %v660
    %962 = vmatmul.bf16.gmra.mxu0 %v198
    %v963 = vpop.f32.mrf.mxu0
    %v964 = vadd.f32 %v334, %v963
    %v965 = vpop.f32.mrf.mxu0
    %966 = vdwg.mxu0
    %967 = vmatpush.bf16.msra.mxu0 %v705
    %968 = vmatpush.bf16.msra.mxu0 %v702
    %969 = vmatpush.bf16.msra.mxu0 %v699
    %970 = vmatpush.bf16.msra.mxu0 %v696
    %971 = vmatpush.bf16.msra.mxu0 %v693
    %972 = vmatpush.bf16.msra.mxu0 %v690
    %973 = vmatpush.bf16.msra.mxu0 %v687
    %974 = vmatpush.bf16.msra.mxu0 %v684
    %975 = vmatmul.bf16.gmra.mxu0 %v199
    %v976 = vpop.f32.mrf.mxu0
    %v977 = vadd.f32 %v964, %v976
    %v978 = vpop.f32.mrf.mxu0
    %979 = vdwg.mxu0
    %980 = vmatpush.bf16.msra.mxu0 %v729
    %981 = vmatpush.bf16.msra.mxu0 %v726
    %982 = vmatpush.bf16.msra.mxu0 %v723
    %983 = vmatpush.bf16.msra.mxu0 %v720
    %984 = vmatpush.bf16.msra.mxu0 %v717
    %985 = vmatpush.bf16.msra.mxu0 %v714
    %986 = vmatpush.bf16.msra.mxu0 %v711
    %987 = vmatpush.bf16.msra.mxu0 %v708
    %988 = vmatmul.bf16.gmra.mxu0 %v200
    %v989 = vpop.f32.mrf.mxu0
    %v990 = vadd.f32 %v977, %v989
    %v991 = vpop.f32.mrf.mxu0
    %992 = vdwg.mxu0
    %993 = vmatpush.bf16.msra.mxu0 %v753
    %994 = vmatpush.bf16.msra.mxu0 %v750
    %995 = vmatpush.bf16.msra.mxu0 %v747
    %996 = vmatpush.bf16.msra.mxu0 %v744
    %997 = vmatpush.bf16.msra.mxu0 %v741
    %998 = vmatpush.bf16.msra.mxu0 %v738
    %999 = vmatpush.bf16.msra.mxu0 %v735
    %1000 = vmatpush.bf16.msra.mxu0 %v732
    %1001 = vmatmul.bf16.gmra.mxu0 %v201
    %v1002 = vpop.f32.mrf.mxu0
    %v1003 = vadd.f32 %v990, %v1002
    %v1004 = vpop.f32.mrf.mxu0
    %1005 = vdwg.mxu0
    %v1006 = vmax.f32 %v899, 0.0
    %v1007 = vmax.f32 %v951, 0.0
    %v1008 = vmax.f32 %v1003, 0.0
    %v1009 = vpack.c.bf16 %v1006, %v1006
    %v1010 = vpack.c.bf16 %v1007, %v1007
    %v1011 = vpack.c.bf16 %v1008, %v1008
    %v1012 = vld [vmem:[#allocation10] sm:$0xf]
    %v1013 = vld [vmem:[#allocation10 + $0x4] sm:$0xf]
    %v1014 = vld [vmem:[#allocation10 + $0x8] sm:$0xf]
    %v1015 = vld [vmem:[#allocation10 + $0xc] sm:$0xf]
    %v1016 = vld [vmem:[#allocation10 + $0x10] sm:$0xf]
    %v1017 = vld [vmem:[#allocation10 + $0x14] sm:$0xf]
    %v1018 = vld [vmem:[#allocation10 + $0x18] sm:$0xf]
    %v1019 = vld [vmem:[#allocation10 + $0x1c] sm:$0xf]
    %v1020 = vld [vmem:[#allocation10 + $0x20] sm:$0xf]
    %v1021 = vld [vmem:[#allocation10 + $0x24] sm:$0xf]
    %v1022 = vld [vmem:[#allocation10 + $0x28] sm:$0xf]
    %v1023 = vld [vmem:[#allocation10 + $0x2c] sm:$0xf]
    %v1024 = vld [vmem:[#allocation10 + $0x30] sm:$0xf]
    %v1025 = vld [vmem:[#allocation10 + $0x34] sm:$0xf]
    %v1026 = vld [vmem:[#allocation10 + $0x38] sm:$0xf]
    %v1027 = vld [vmem:[#allocation10 + $0x3c] sm:$0xf]
    %v1028 = vld [vmem:[#allocation10 + $0x40] sm:$0xf]
    %v1029 = vld [vmem:[#allocation10 + $0x44] sm:$0xf]
    %v1030 = vld [vmem:[#allocation10 + $0x48] sm:$0xf]
    %v1031 = vld [vmem:[#allocation10 + $0x4c] sm:$0xf]
    %v1032 = vld [vmem:[#allocation10 + $0x50] sm:$0xf]
    %v1033 = vld [vmem:[#allocation10 + $0x54] sm:$0xf]
    %v1034 = vld [vmem:[#allocation10 + $0x58] sm:$0xf]
    %v1035 = vld [vmem:[#allocation10 + $0x5c] sm:$0xf]
    %v1036 = vld [vmem:[#allocation10 + $0x60] sm:$0xf]
    %v1037 = vld [vmem:[#allocation10 + $0x64] sm:$0xf]
    %v1038 = vld [vmem:[#allocation10 + $0x68] sm:$0xf]
    %v1039 = vld [vmem:[#allocation10 + $0x6c] sm:$0xf]
    %v1040 = vld [vmem:[#allocation10 + $0x70] sm:$0xf]
    %v1041 = vld [vmem:[#allocation10 + $0x74] sm:$0xf]
    %v1042 = vld [vmem:[#allocation10 + $0x78] sm:$0xf]
    %v1043 = vld [vmem:[#allocation10 + $0x7c] sm:$0xf]
    %v1044 = vld [vmem:[#allocation10 + $0x80] sm:$0xf]
    %v1045 = vld [vmem:[#allocation10 + $0x84] sm:$0xf]
    %v1046 = vld [vmem:[#allocation10 + $0x88] sm:$0xf]
    %v1047 = vld [vmem:[#allocation10 + $0x8c] sm:$0xf]
    %v1048 = vld [vmem:[#allocation10 + $0x90] sm:$0xf]
    %v1049 = vld [vmem:[#allocation10 + $0x94] sm:$0xf]
    %v1050 = vld [vmem:[#allocation10 + $0x98] sm:$0xf]
    %v1051 = vld [vmem:[#allocation10 + $0x9c] sm:$0xf]
    %v1052 = vld [vmem:[#allocation10 + $0xa0] sm:$0xf]
    %v1053 = vld [vmem:[#allocation10 + $0xa4] sm:$0xf]
    %v1054 = vld [vmem:[#allocation10 + $0xa8] sm:$0xf]
    %v1055 = vld [vmem:[#allocation10 + $0xac] sm:$0xf]
    %v1056 = vld [vmem:[#allocation10 + $0xb0] sm:$0xf]
    %v1057 = vld [vmem:[#allocation10 + $0xb4] sm:$0xf]
    %v1058 = vld [vmem:[#allocation10 + $0xb8] sm:$0xf]
    %v1059 = vld [vmem:[#allocation10 + $0xbc] sm:$0xf]
    %v1060 = vld [vmem:[%s6] sm:$0x1]
    %v1062 = vperm.slane %v1060, 0
    %v1112 = vunpack.c.l.b16 %v1012
    %v1113 = vunpack.c.l.b16 %v1013
    %v1114 = vunpack.c.l.b16 %v1014
    %v1115 = vunpack.c.l.b16 %v1015
    %v1116 = vunpack.c.l.b16 %v1016
    %v1117 = vunpack.c.l.b16 %v1017
    %v1118 = vunpack.c.l.b16 %v1018
    %v1119 = vunpack.c.l.b16 %v1019
    %v1120 = vunpack.c.l.b16 %v1020
    %v1121 = vunpack.c.l.b16 %v1021
    %v1122 = vunpack.c.l.b16 %v1022
    %v1123 = vunpack.c.l.b16 %v1023
    %v1124 = vunpack.c.l.b16 %v1024
    %v1125 = vunpack.c.l.b16 %v1025
    %v1126 = vunpack.c.l.b16 %v1026
    %v1127 = vunpack.c.l.b16 %v1027
    %v1128 = vunpack.c.l.b16 %v1028
    %v1129 = vunpack.c.l.b16 %v1029
    %v1130 = vunpack.c.l.b16 %v1030
    %v1131 = vunpack.c.l.b16 %v1031
    %v1132 = vunpack.c.l.b16 %v1032
    %v1133 = vunpack.c.l.b16 %v1033
    %v1134 = vunpack.c.l.b16 %v1034
    %v1135 = vunpack.c.l.b16 %v1035
    %v1136 = vunpack.c.l.b16 %v1036
    %v1137 = vunpack.c.l.b16 %v1037
    %v1138 = vunpack.c.l.b16 %v1038
    %v1139 = vunpack.c.l.b16 %v1039
    %v1140 = vunpack.c.l.b16 %v1040
    %v1141 = vunpack.c.l.b16 %v1041
    %v1142 = vunpack.c.l.b16 %v1042
    %v1143 = vunpack.c.l.b16 %v1043
    %v1144 = vunpack.c.l.b16 %v1044
    %v1145 = vunpack.c.l.b16 %v1045
    %v1146 = vunpack.c.l.b16 %v1046
    %v1147 = vunpack.c.l.b16 %v1047
    %v1148 = vunpack.c.l.b16 %v1048
    %v1149 = vunpack.c.l.b16 %v1049
    %v1150 = vunpack.c.l.b16 %v1050
    %v1151 = vunpack.c.l.b16 %v1051
    %v1152 = vunpack.c.l.b16 %v1052
    %v1153 = vunpack.c.l.b16 %v1053
    %v1154 = vunpack.c.l.b16 %v1054
    %v1155 = vunpack.c.l.b16 %v1055
    %v1156 = vunpack.c.l.b16 %v1056
    %v1157 = vunpack.c.l.b16 %v1057
    %v1158 = vunpack.c.l.b16 %v1058
    %v1159 = vunpack.c.l.b16 %v1059
    %v1160 = vpack.c.b16 %v1113, %v1112
    %v1161 = vpack.c.b16 %v1115, %v1114
    %v1162 = vpack.c.b16 %v1117, %v1116
    %v1163 = vpack.c.b16 %v1119, %v1118
    %v1164 = vpack.c.b16 %v1121, %v1120
    %v1165 = vpack.c.b16 %v1123, %v1122
    %v1166 = vpack.c.b16 %v1125, %v1124
    %v1167 = vpack.c.b16 %v1127, %v1126
    %v1168 = vpack.c.b16 %v1129, %v1128
    %v1169 = vpack.c.b16 %v1131, %v1130
    %v1170 = vpack.c.b16 %v1133, %v1132
    %v1171 = vpack.c.b16 %v1135, %v1134
    %v1172 = vpack.c.b16 %v1137, %v1136
    %v1173 = vpack.c.b16 %v1139, %v1138
    %v1174 = vpack.c.b16 %v1141, %v1140
    %v1175 = vpack.c.b16 %v1143, %v1142
    %v1176 = vpack.c.b16 %v1145, %v1144
    %v1177 = vpack.c.b16 %v1147, %v1146
    %v1178 = vpack.c.b16 %v1149, %v1148
    %v1179 = vpack.c.b16 %v1151, %v1150
    %v1180 = vpack.c.b16 %v1153, %v1152
    %v1181 = vpack.c.b16 %v1155, %v1154
    %v1182 = vpack.c.b16 %v1157, %v1156
    %v1183 = vpack.c.b16 %v1159, %v1158
    %1208 = vmatpush.bf16.msra.mxu0 %v1167
    %1209 = vmatpush.bf16.msra.mxu0 %v1166
    %1210 = vmatpush.bf16.msra.mxu0 %v1165
    %1211 = vmatpush.bf16.msra.mxu0 %v1164
    %1212 = vmatpush.bf16.msra.mxu0 %v1163
    %1213 = vmatpush.bf16.msra.mxu0 %v1162
    %1214 = vmatpush.bf16.msra.mxu0 %v1161
    %1215 = vmatpush.bf16.msra.mxu0 %v1160
    %1216 = vmatmul.bf16.gmra.mxu0 %v1009
    %v1217 = vpop.f32.mrf.mxu0
    %v1218 = vadd.f32 %v1062, %v1217
    %v1219 = vpop.f32.mrf.mxu0
    %1220 = vdwg.mxu0
    %1221 = vmatpush.bf16.msra.mxu0 %v1175
    %1222 = vmatpush.bf16.msra.mxu0 %v1174
    %1223 = vmatpush.bf16.msra.mxu0 %v1173
    %1224 = vmatpush.bf16.msra.mxu0 %v1172
    %1225 = vmatpush.bf16.msra.mxu0 %v1171
    %1226 = vmatpush.bf16.msra.mxu0 %v1170
    %1227 = vmatpush.bf16.msra.mxu0 %v1169
    %1228 = vmatpush.bf16.msra.mxu0 %v1168
    %1229 = vmatmul.bf16.gmra.mxu0 %v1010
    %v1230 = vpop.f32.mrf.mxu0
    %v1231 = vadd.f32 %v1218, %v1230
    %v1232 = vpop.f32.mrf.mxu0
    %1233 = vdwg.mxu0
    %1234 = vmatpush.bf16.msra.mxu0 %v1183
    %1235 = vmatpush.bf16.msra.mxu0 %v1182
    %1236 = vmatpush.bf16.msra.mxu0 %v1181
    %1237 = vmatpush.bf16.msra.mxu0 %v1180
    %1238 = vmatpush.bf16.msra.mxu0 %v1179
    %1239 = vmatpush.bf16.msra.mxu0 %v1178
    %1240 = vmatpush.bf16.msra.mxu0 %v1177
    %1241 = vmatpush.bf16.msra.mxu0 %v1176
    %1242 = vmatmul.bf16.gmra.mxu0 %v1011
    %v1243 = vpop.f32.mrf.mxu0
    %v1244 = vadd.f32 %v1231, %v1243
    %v1245 = vpop.f32.mrf.mxu0
    %1246 = vdwg.mxu0
    %v1247 = vtanh.pop %v1244
    %v1248 = vmul.f32 %v1247, 2.0
    %1249 = vst [vmem:[#allocation11] sm:$0xff] %v1248
    // Predicated region
    $region50: #{tpu_custom_call.1} parent=1 // pred_check
      _
    $region51: #{tpu_custom_call.1} parent=1 // pred_check_branch
      %1251 = sbr.rel (0) target = $region53
    $region52: #{tpu_custom_call.1} parent=1 // pred_region
      %1253 = vsyncadd [#allocation4], 0
      %s1255 = sshll.u32 [#allocation11], 4
      %s1256 = int_to_ptr.vmem [resolvable:$true] %s1255
      %s1257 = sshll.u32 %s7, 4
      %s1258 = int_to_ptr.hbm [resolvable:$true] %s1257
      %1260 = dma.vmem_to_hbm [thread:$0]  %s1256, 128, %s1258, [#allocation4]
    $region53: #{tpu_custom_call.1} parent=1 // pred_fallthru
      _
    // Predicated region
    $region54: #{tpu_custom_call.1} parent=1 // pred_check
      _
    $region55: #{tpu_custom_call.1} parent=1 // pred_check_branch
      %1262 = sbr.rel (0) target = $region57
    $region56: #{tpu_custom_call.1} parent=1 // pred_region
      %1264 = dma.done [#allocation4], 128
    $region57: #{tpu_custom_call.1} parent=1 // pred_fallthru
      _
    %1265 = vsyncpa [#allocation3], 1
    %1266 = vsyncpa [#allocation6], 1
    %1267 = vsyncpa [#allocation9], 1
    %1268 = vsyncpa [#allocation4], 1

</llo_original>
